<compile_context>
chip_gen: v6e
topology: v6e:2x2x1
jax: 0.10.0
libtpu: 0.0.40
codegen_flags: <defaults>
</compile_context>

<pallas_src>
import functools

import jax
import jax.numpy as jnp
from jax.experimental import pallas as pl
from jax.experimental.pallas import tpu as pltpu


def _round_up(n, m):
    return ((n + m - 1) // m) * m


def _cdiv(a, b):
    return (a + b - 1) // b


def mlmp_kernel(x_ref, w1_ref, b1_ref, w2_ref, b2_ref, w3_ref, b3_ref, o_ref,
                *, mxu_dtype):
    """relu(x@W1+b1) -> relu(.@W2+b2) -> sigmoid(<., w3>+b3) as a (1,1,tb) row."""
    x = x_ref[...]                         # (tb, D)
    w1 = w1_ref[...]                       # (D, H1)
    if mxu_dtype is not None:
        # In-kernel cast (post-DMA): no extra HBM traffic, fewer MXU passes on
        # v5e/v6e (no native f32 MXU path).  Accumulation stays f32.
        x = x.astype(mxu_dtype)
        w1 = w1.astype(mxu_dtype)
    h1 = jnp.dot(x, w1, preferred_element_type=jnp.float32) + b1_ref[...]
    h1 = jnp.maximum(h1, 0.0)              # (tb, H1) f32

    w2 = w2_ref[...]                       # (H1, H2)
    h1m = h1
    if mxu_dtype is not None:
        h1m = h1.astype(mxu_dtype)
        w2 = w2.astype(mxu_dtype)
    h2 = jnp.dot(h1m, w2, preferred_element_type=jnp.float32) + b2_ref[...]
    h2 = jnp.maximum(h2, 0.0)              # (tb, H2) f32

    # Final layer H2 -> 1, emitted directly as a lane-dense (1, tb) row.
    # Transposed-rhs contraction (q@k^T pattern); cheap vs. the HBM-bound x
    # stream and avoids any (tb, 1) -> (1, tb) relayout or masked narrow store.
    w3 = w3_ref[...].astype(jnp.float32)   # (1, H2)
    logits = jnp.einsum("oh,bh->ob", w3, h2,
                        preferred_element_type=jnp.float32) + b3_ref[...]  # (1, tb)
    o_ref[...] = jax.nn.sigmoid(logits).reshape(o_ref.shape).astype(o_ref.dtype)


def mlmp_forward(x, params, *, tb=4096, mxu_dtype=None, out_dtype=jnp.float32):
    """Run the fused MLP kernel, tiling over the batch dimension."""
    w1, b1, w2, b2, w3, b3 = params
    B, D = x.shape
    H1 = w1.shape[1]
    H2 = w2.shape[1]
    assert w3.shape[-1] == 1, "MLMP output layer is 16 -> 1"

    # fc3 weight as a (1, H2) row; biases as f32 row vectors.  Only these tiny
    # tensors are reshaped/cast in the wrapper — x is streamed as-is (casting x
    # in the wrapper would be an extra full HBM pass).
    w3_row = jnp.reshape(w3, (H2, 1)).T.astype(jnp.float32)
    w1 = w1.astype(jnp.float32)
    w2 = w2.astype(jnp.float32)
    b1r = jnp.reshape(b1, (1, H1)).astype(jnp.float32)
    b2r = jnp.reshape(b2, (1, H2)).astype(jnp.float32)
    b3r = jnp.reshape(b3, (1, 1)).astype(jnp.float32)

    # --- batch tile selection -------------------------------------------------
    tb_req = max(128, _round_up(int(tb), 128))
    if _round_up(B, 8) <= min(tb_req, 1024):
        # Small batch: one tile covering the whole (8-padded) batch.
        tb_eff = _round_up(B, 8)
    else:
        # Large batch: big lane-dense tiles, but keep >= 2 tiles so the
        # "parallel" batch axis can be sharded across v7x's two TensorCores.
        tb_eff = min(tb_req, max(128, _round_up(_cdiv(B, 2), 128)))
    B_pad = _round_up(B, tb_eff)
    num_tiles = B_pad // tb_eff
    if B_pad != B:
        # Padded rows compute independent garbage and are sliced off below.
        x = jnp.pad(x, ((0, B_pad - B), (0, 0)))

    full2 = lambda shape: pl.BlockSpec(shape, lambda i: (0, 0))

    cost = pl.CostEstimate(
        flops=2 * B_pad * (D * H1 + H1 * H2 + H2),
        transcendentals=B_pad,
        bytes_accessed=(B_pad * D * jnp.dtype(x.dtype).itemsize
                        + (D * H1 + H1 * H2 + H2 + H1 + H2 + 1) * 4
                        + B_pad * jnp.dtype(out_dtype).itemsize),
    )

    out = pl.pallas_call(
        functools.partial(mlmp_kernel, mxu_dtype=mxu_dtype),
        out_shape=jax.ShapeDtypeStruct((num_tiles, 1, tb_eff), out_dtype),
        grid=(num_tiles,),
        in_specs=[
            # x streams from HBM; weights/biases are VMEM-resident (constant
            # index_map -> fetched once).
            pl.BlockSpec((tb_eff, D), lambda i: (i, 0)),
            full2((D, H1)), full2((1, H1)),       # fc1
            full2((H1, H2)), full2((1, H2)),      # fc2
            full2((1, H2)), full2((1, 1)),        # fc3 row + bias
        ],
        out_specs=pl.BlockSpec((1, 1, tb_eff), lambda i: (i, 0, 0)),  # lane-dense row
        compiler_params=pltpu.CompilerParams(
            dimension_semantics=("parallel",),
            vmem_limit_bytes=64 * 1024 * 1024,
        ),
        cost_estimate=cost,
    )(x, w1, b1r, w2, b2r, w3_row, b3r)

    return out.reshape(B_pad, 1)[:B]


def init_params(key, input_size):
    """Deterministic init mimicking PyTorch nn.Linear default (U[-1/sqrt(fan_in), +])."""
    dims = [(input_size, 32), (32, 16), (16, 1)]
    params = []
    for (fan_in, fan_out) in dims:
        key, kw, kb = jax.random.split(key, 3)
        bound = 1.0 / jnp.sqrt(jnp.float32(fan_in))
        w = jax.random.uniform(kw, (fan_in, fan_out), jnp.float32, -bound, bound)
        b = jax.random.uniform(kb, (1, fan_out), jnp.float32, -bound, bound)
        params += [w, b]
    return tuple(params)


def mlmp_reference(x, params):
    """Pure-JAX reference for correctness checking."""
    w1, b1, w2, b2, w3, b3 = params
    h1 = jnp.maximum(x @ w1 + b1, 0.0)
    h2 = jnp.maximum(h1 @ w2 + b2, 0.0)
    return jax.nn.sigmoid(h2 @ w3 + b3)


if __name__ == "__main__":
    key = jax.random.PRNGKey(0)
    input_size = 32

    kx, kp = jax.random.split(key)
    params = init_params(kp, input_size)

    # Tolerance note: kernel MXU dots and the XLA reference may use slightly
    # different f32-matmul emulation (bf16 pass counts), so compare at 5e-3 on
    # sigmoid outputs; the bf16 MXU path is checked at 5e-2.
    TOL = 5e-3

    # Small shape matching the module spec (batch=8, features=32).
    x_small = jax.random.normal(kx, (8, input_size), jnp.float32)
    out = jax.block_until_ready(mlmp_forward(x_small, params))
    ref = mlmp_reference(x_small, params)
    assert out.shape == (8, 1), out.shape
    assert jnp.allclose(out, ref, atol=TOL), "mismatch (B=8)"

    # Ragged batch (B not a multiple of 8/tile): exercises the padding path.
    x_ragged = jax.random.normal(jax.random.PRNGKey(1), (13, input_size), jnp.float32)
    out_r = jax.block_until_ready(mlmp_forward(x_ragged, params))
    ref_r = mlmp_reference(x_ragged, params)
    assert out_r.shape == (13, 1)
    assert jnp.allclose(out_r, ref_r, atol=TOL), "mismatch (B=13)"

    # Multi-tile, lane-dense output path (tb=128 -> 3 grid steps, padded batch).
    x_big = jax.random.normal(jax.random.PRNGKey(2), (300, input_size), jnp.float32)
    out_b = jax.block_until_ready(mlmp_forward(x_big, params, tb=128))
    ref_b = mlmp_reference(x_big, params)
    assert out_b.shape == (300, 1)
    assert jnp.allclose(out_b, ref_b, atol=TOL), "mismatch (B=300)"

    # Production path: default large tile, >=2 tiles (megacore), padded batch.
    x_large = jax.random.normal(jax.random.PRNGKey(3), (4173, input_size), jnp.float32)
    out_l = jax.block_until_ready(mlmp_forward(x_large, params))
    ref_l = mlmp_reference(x_large, params)
    assert out_l.shape == (4173, 1)
    assert jnp.allclose(out_l, ref_l, atol=TOL), "mismatch (B=4173)"

    # bf16 MXU operands cast in-kernel (f32 accumulation) — the fast MXU path.
    out_bf16 = jax.block_until_ready(
        mlmp_forward(x_large, params, mxu_dtype=jnp.bfloat16))
    assert out_bf16.shape == (4173, 1)
    assert jnp.allclose(out_bf16, ref_l, atol=5e-2), "bf16 mismatch (B=4173)"

    print("KERNEL_OK")
</pallas_src>

<mosaic_0001>
module attributes {stable_mosaic.version = 11 : i64} {
  func.func @mlmp_kernel(%arg0: i32, %arg1: memref<8x32xf32, #tpu.memory_space<vmem>>, %arg2: memref<32x32xf32, #tpu.memory_space<vmem>>, %arg3: memref<1x32xf32, #tpu.memory_space<vmem>>, %arg4: memref<32x16xf32, #tpu.memory_space<vmem>>, %arg5: memref<1x16xf32, #tpu.memory_space<vmem>>, %arg6: memref<1x16xf32, #tpu.memory_space<vmem>>, %arg7: memref<1x1xf32, #tpu.memory_space<vmem>>, %arg8: memref<1x1x8xf32, #tpu.memory_space<vmem>>) attributes {dimension_semantics = [#tpu.dimension_semantics<parallel>], iteration_bounds = array<i64: 1>, scalar_prefetch = 0 : i64, scratch_operands = 0 : i64, tpu.core_type = #tpu.core_type<tc>, window_params = [{transform_indices = @transform_0, window_bounds = array<i64: 8, 32>}, {pipeline_mode = #tpu.pipeline_mode<synchronous>, transform_indices = @transform_1, window_bounds = array<i64: 32, 32>}, {pipeline_mode = #tpu.pipeline_mode<synchronous>, transform_indices = @transform_2, window_bounds = array<i64: 1, 32>}, {pipeline_mode = #tpu.pipeline_mode<synchronous>, transform_indices = @transform_3, window_bounds = array<i64: 32, 16>}, {pipeline_mode = #tpu.pipeline_mode<synchronous>, transform_indices = @transform_4, window_bounds = array<i64: 1, 16>}, {pipeline_mode = #tpu.pipeline_mode<synchronous>, transform_indices = @transform_5, window_bounds = array<i64: 1, 16>}, {pipeline_mode = #tpu.pipeline_mode<synchronous>, transform_indices = @transform_6, window_bounds = array<i64: 1, 1>}, {transform_indices = @transform_7, window_bounds = array<i64: 1, 1, 8>}]} {
    %c0 = arith.constant 0 : index
    %c0_0 = arith.constant 0 : index
    %0 = vector.load %arg1[%c0, %c0_0] : memref<8x32xf32, #tpu.memory_space<vmem>>, vector<8x32xf32>
    %c0_1 = arith.constant 0 : index
    %c0_2 = arith.constant 0 : index
    %1 = vector.load %arg2[%c0_1, %c0_2] : memref<32x32xf32, #tpu.memory_space<vmem>>, vector<32x32xf32>
    %cst = arith.constant dense<0.000000e+00> : vector<8x32xf32>
    %2 = tpu.matmul %0, %1, %cst {dimension_numbers = #tpu.dot_dimension_numbers<[1], [0], [0], [1], [0, 0, 1, 1], [], []>} : vector<8x32xf32>, vector<32x32xf32>, vector<8x32xf32> -> vector<8x32xf32>
    %c0_3 = arith.constant 0 : index
    %c0_4 = arith.constant 0 : index
    %3 = vector.load %arg3[%c0_3, %c0_4] : memref<1x32xf32, #tpu.memory_space<vmem>>, vector<1x32xf32>
    %4 = vector.broadcast %3 : vector<1x32xf32> to vector<8x32xf32>
    %5 = arith.addf %2, %4 : vector<8x32xf32>
    %cst_5 = arith.constant 0.000000e+00 : f32
    %6 = vector.broadcast %cst_5 : f32 to vector<8x32xf32>
    %7 = arith.maximumf %5, %6 : vector<8x32xf32>
    %c0_6 = arith.constant 0 : index
    %c0_7 = arith.constant 0 : index
    %8 = vector.load %arg4[%c0_6, %c0_7] : memref<32x16xf32, #tpu.memory_space<vmem>>, vector<32x16xf32>
    %cst_8 = arith.constant dense<0.000000e+00> : vector<8x16xf32>
    %9 = tpu.matmul %7, %8, %cst_8 {dimension_numbers = #tpu.dot_dimension_numbers<[1], [0], [0], [1], [0, 0, 1, 1], [], []>} : vector<8x32xf32>, vector<32x16xf32>, vector<8x16xf32> -> vector<8x16xf32>
    %c0_9 = arith.constant 0 : index
    %c0_10 = arith.constant 0 : index
    %10 = vector.load %arg5[%c0_9, %c0_10] : memref<1x16xf32, #tpu.memory_space<vmem>>, vector<1x16xf32>
    %11 = vector.broadcast %10 : vector<1x16xf32> to vector<8x16xf32>
    %12 = arith.addf %9, %11 : vector<8x16xf32>
    %cst_11 = arith.constant 0.000000e+00 : f32
    %13 = vector.broadcast %cst_11 : f32 to vector<8x16xf32>
    %14 = arith.maximumf %12, %13 : vector<8x16xf32>
    %c0_12 = arith.constant 0 : index
    %c0_13 = arith.constant 0 : index
    %15 = vector.load %arg6[%c0_12, %c0_13] : memref<1x16xf32, #tpu.memory_space<vmem>>, vector<1x16xf32>
    "tpu.trace_start"() <{level = 10 : i32, message = "oh,bh->ob"}> : () -> ()
    %cst_14 = arith.constant dense<0.000000e+00> : vector<1x8xf32>
    %16 = tpu.matmul %15, %14, %cst_14 {dimension_numbers = #tpu.dot_dimension_numbers<[1], [1], [0], [0], [0, 0, 1, 0], [], []>} : vector<1x16xf32>, vector<8x16xf32>, vector<1x8xf32> -> vector<1x8xf32>
    "tpu.trace_stop"() : () -> ()
    %c0_15 = arith.constant 0 : index
    %c0_16 = arith.constant 0 : index
    %17 = vector.load %arg7[%c0_15, %c0_16] : memref<1x1xf32, #tpu.memory_space<vmem>>, vector<1x1xf32>
    %18 = vector.broadcast %17 : vector<1x1xf32> to vector<1x8xf32>
    %19 = arith.addf %16, %18 : vector<1x8xf32>
    %20 = arith.negf %19 : vector<1x8xf32>
    %21 = math.exp %20 : vector<1x8xf32>
    %cst_17 = arith.constant 1.000000e+00 : f32
    %22 = vector.broadcast %cst_17 : f32 to vector<1x8xf32>
    %23 = arith.addf %22, %21 : vector<1x8xf32>
    %24 = arith.divf %22, %23 : vector<1x8xf32>
    %25 = vector.shape_cast %24 : vector<1x8xf32> to vector<1x1x8xf32>
    %c0_18 = arith.constant 0 : index
    %c0_19 = arith.constant 0 : index
    %c0_20 = arith.constant 0 : index
    %26 = vector.load %arg8[%c0_18, %c0_19, %c0_20] : memref<1x1x8xf32, #tpu.memory_space<vmem>>, vector<1x1x8xf32>
    tpu.vector_store %arg8[%c0_18, %c0_19, %c0_20], %25 {strides = array<i32>} : memref<1x1x8xf32, #tpu.memory_space<vmem>>, vector<1x1x8xf32>,
    return
  }
  func.func @transform_0(%arg0: i32) -> (i32, i32) {
    %c0_i32 = arith.constant 0 : i32
    %c0_i32_0 = arith.constant 0 : i32
    return %arg0, %c0_i32 : i32, i32
  }
  func.func @transform_1(%arg0: i32) -> (i32, i32) {
    %c0_i32 = arith.constant 0 : i32
    %c0_i32_0 = arith.constant 0 : i32
    %c0_i32_1 = arith.constant 0 : i32
    return %c0_i32, %c0_i32_0 : i32, i32
  }
  func.func @transform_2(%arg0: i32) -> (i32, i32) {
    %c0_i32 = arith.constant 0 : i32
    %c0_i32_0 = arith.constant 0 : i32
    %c0_i32_1 = arith.constant 0 : i32
    return %c0_i32, %c0_i32_0 : i32, i32
  }
  func.func @transform_3(%arg0: i32) -> (i32, i32) {
    %c0_i32 = arith.constant 0 : i32
    %c0_i32_0 = arith.constant 0 : i32
    %c0_i32_1 = arith.constant 0 : i32
    return %c0_i32, %c0_i32_0 : i32, i32
  }
  func.func @transform_4(%arg0: i32) -> (i32, i32) {
    %c0_i32 = arith.constant 0 : i32
    %c0_i32_0 = arith.constant 0 : i32
    %c0_i32_1 = arith.constant 0 : i32
    return %c0_i32, %c0_i32_0 : i32, i32
  }
  func.func @transform_5(%arg0: i32) -> (i32, i32) {
    %c0_i32 = arith.constant 0 : i32
    %c0_i32_0 = arith.constant 0 : i32
    %c0_i32_1 = arith.constant 0 : i32
    return %c0_i32, %c0_i32_0 : i32, i32
  }
  func.func @transform_6(%arg0: i32) -> (i32, i32) {
    %c0_i32 = arith.constant 0 : i32
    %c0_i32_0 = arith.constant 0 : i32
    %c0_i32_1 = arith.constant 0 : i32
    return %c0_i32, %c0_i32_0 : i32, i32
  }
  func.func @transform_7(%arg0: i32) -> (i32, i32, i32) {
    %c0_i32 = arith.constant 0 : i32
    %c0_i32_0 = arith.constant 0 : i32
    %c0_i32_1 = arith.constant 0 : i32
    return %arg0, %c0_i32, %c0_i32_0 : i32, i32, i32
  }
}

</mosaic_0001>

<llo_original>
// kernel: tpu_custom_call.1
$region0: #{tpu_custom_call.1}
  #allocation0 [shape = 'u32[]', space=smem, size = 0x4, offset = 0x4, fixed_abs, tag = 'smem constant byte address 0x4 - core index']
  #allocation1 [shape = 'u32[144,128]{1,0:T(1,128)}', space=vmem, size = 0x12000, scoped, tag = 'internal scratch']
  #allocation2 [shape = 'f32[1,1]{1,0:T(1,128)S(1)}', space=vmem, size = 0x200, scoped, tag = 'scoped memory for tpu_custom_call.1']
  %s0 = inlined_call_operand.vmem [shape: f32[8,32], index: 0, kind: input, shape index: {}]
  %s1 = inlined_call_operand.vmem [shape: f32[32,32], index: 1, kind: input, shape index: {}]
  %s2 = inlined_call_operand.vmem [shape: f32[1,32], index: 2, kind: input, shape index: {}]
  %s3 = inlined_call_operand.vmem [shape: f32[32,16], index: 3, kind: input, shape index: {}]
  %s4 = inlined_call_operand.vmem [shape: f32[1,16], index: 4, kind: input, shape index: {}]
  %s5 = inlined_call_operand.vmem [shape: f32[1,16], index: 5, kind: input, shape index: {}]
  %s6 = inlined_call_operand.<no memory space> [shape: f32[1,1], index: 6, kind: input, shape index: {}]
  %s7 = inlined_call_operand.hbm [shape: f32[1,1,8], index: 7, kind: output, shape index: {}]
  %s8 = sld [smem:[#allocation0]]
  $region38: #{tpu_custom_call.1} parent=0
    _
  %s10 = ssub.s32 1, %s8
  %s11 = scalar_select 0, %s10, %s8
  %v12 = vstv %s6
  %13 = vst [vmem:[#allocation2] sm:$0x1] %v12
  $region1: #{tpu_custom_call.1} parent=0
    #allocation3 [shape = 'u8[512]{0}', space=vmem, size = 0x400, scoped, tag = 'output window, operand 0, single buffered']
    #allocation4 [shape = 's32[1]{0}', space=sflag, size = 0x4, scoped, tag = 'scoped memory for tpu_custom_call.1']
    %14 = vsyncpa [#allocation4], 0
    // Predicated region
    $region2: #{tpu_custom_call.1} parent=1 // pred_check
      _
    $region3: #{tpu_custom_call.1} parent=1 // pred_check_branch
      %16 = sbr.rel (0) target = $region5
    $region4: #{tpu_custom_call.1} parent=1 // pred_region
      _
    $region5: #{tpu_custom_call.1} parent=1 // pred_fallthru
      _
    // Predicated region
    $region6: #{tpu_custom_call.1} parent=1 // pred_check
      _
    $region7: #{tpu_custom_call.1} parent=1 // pred_check_branch
      %18 = sbr.rel (0) target = $region9
    $region8: #{tpu_custom_call.1} parent=1 // pred_region
      _
    $region9: #{tpu_custom_call.1} parent=1 // pred_fallthru
      _
    // Predicated region
    $region10: #{tpu_custom_call.1} parent=1 // pred_check
      _
    $region11: #{tpu_custom_call.1} parent=1 // pred_check_branch
      %20 = sbr.rel (0) target = $region13
    $region12: #{tpu_custom_call.1} parent=1 // pred_region
      _
    $region13: #{tpu_custom_call.1} parent=1 // pred_fallthru
      _
    // Predicated region
    $region14: #{tpu_custom_call.1} parent=1 // pred_check
      _
    $region15: #{tpu_custom_call.1} parent=1 // pred_check_branch
      %22 = sbr.rel (0) target = $region17
    $region16: #{tpu_custom_call.1} parent=1 // pred_region
      _
    $region17: #{tpu_custom_call.1} parent=1 // pred_fallthru
      _
    // Predicated region
    $region18: #{tpu_custom_call.1} parent=1 // pred_check
      _
    $region19: #{tpu_custom_call.1} parent=1 // pred_check_branch
      %24 = sbr.rel (0) target = $region21
    $region20: #{tpu_custom_call.1} parent=1 // pred_region
      _
    $region21: #{tpu_custom_call.1} parent=1 // pred_fallthru
      _
    // Predicated region
    $region22: #{tpu_custom_call.1} parent=1 // pred_check
      _
    $region23: #{tpu_custom_call.1} parent=1 // pred_check_branch
      %26 = sbr.rel (0) target = $region25
    $region24: #{tpu_custom_call.1} parent=1 // pred_region
      _
    $region25: #{tpu_custom_call.1} parent=1 // pred_fallthru
      _
    // Predicated region
    $region26: #{tpu_custom_call.1} parent=1 // pred_check
      _
    $region27: #{tpu_custom_call.1} parent=1 // pred_check_branch
      %28 = sbr.rel (0) target = $region29
    $region28: #{tpu_custom_call.1} parent=1 // pred_region
      _
    $region29: #{tpu_custom_call.1} parent=1 // pred_fallthru
      _
    %v29 = vld [vmem:[%s0] sm:$0xff]
    %v30 = vld [vmem:[%s1] sm:$0xff]
    %v31 = vld [vmem:[%s1 + $0x8] sm:$0xff]
    %v32 = vld [vmem:[%s1 + $0x10] sm:$0xff]
    %v33 = vld [vmem:[%s1 + $0x18] sm:$0xff]
    %v34 = vld [vmem:[%s2] sm:$0x1]
    %v36 = vlaneseq
    %v37 = vshrl.u32 %v36, 7
    %v38 = vsub.s32 0, %v37
    %v39 = vrot.slane %v34, %v38
    %vm41 = vcmask 261120
    %v43 = vsel %vm41, %v29, 0
    %45 = vmatprep.subr.mxu0 0.0
    %46 = vmatpush1.msra.mxu0 0.0
    %47 = vmatprep.subr.mxu0 0.0
    %48 = vmatpush1.msra.mxu0 0.0
    %49 = vmatprep.subr.mxu0 0.0
    %50 = vmatpush1.msra.mxu0 0.0
    %51 = vmatprep.subr.mxu0 0.0
    %52 = vmatpush1.msra.mxu0 0.0
    %53 = vmatprep.subr.mxu0 0.0
    %54 = vmatpush1.msra.mxu0 0.0
    %55 = vmatprep.subr.mxu0 0.0
    %56 = vmatpush1.msra.mxu0 0.0
    %57 = vmatprep.subr.mxu0 0.0
    %58 = vmatpush1.msra.mxu0 0.0
    %59 = vmatprep.subr.mxu0 0.0
    %60 = vmatpush1.msra.mxu0 0.0
    %61 = vmatprep.subr.mxu0 0.0
    %62 = vmatpush1.msra.mxu0 0.0
    %63 = vmatprep.subr.mxu0 0.0
    %64 = vmatpush1.msra.mxu0 0.0
    %65 = vmatprep.subr.mxu0 0.0
    %66 = vmatpush1.msra.mxu0 0.0
    %67 = vmatprep.subr.mxu0 0.0
    %68 = vmatpush1.msra.mxu0 0.0
    %69 = vmatprep.subr.mxu0 0.0
    %70 = vmatpush1.msra.mxu0 %v33
    %71 = vmatprep.subr.mxu0 0.0
    %72 = vmatpush1.msra.mxu0 %v32
    %73 = vmatprep.subr.mxu0 0.0
    %74 = vmatpush1.msra.mxu0 %v31
    %75 = vmatprep.subr.mxu0 0.0
    %76 = vmatpush1.msra.mxu0 %v30
    %77 = vmatprep.subr.mxu0 0.0
    %78 = vmatpush2.msra.mxu0 0.0
    %79 = vmatprep.subr.mxu0 0.0
    %80 = vmatpush2.msra.mxu0 0.0
    %81 = vmatprep.subr.mxu0 0.0
    %82 = vmatpush2.msra.mxu0 0.0
    %83 = vmatprep.subr.mxu0 0.0
    %84 = vmatpush2.msra.mxu0 0.0
    %85 = vmatprep.subr.mxu0 0.0
    %86 = vmatpush2.msra.mxu0 0.0
    %87 = vmatprep.subr.mxu0 0.0
    %88 = vmatpush2.msra.mxu0 0.0
    %89 = vmatprep.subr.mxu0 0.0
    %90 = vmatpush2.msra.mxu0 0.0
    %91 = vmatprep.subr.mxu0 0.0
    %92 = vmatpush2.msra.mxu0 0.0
    %93 = vmatprep.subr.mxu0 0.0
    %94 = vmatpush2.msra.mxu0 0.0
    %95 = vmatprep.subr.mxu0 0.0
    %96 = vmatpush2.msra.mxu0 0.0
    %97 = vmatprep.subr.mxu0 0.0
    %98 = vmatpush2.msra.mxu0 0.0
    %99 = vmatprep.subr.mxu0 0.0
    %100 = vmatpush2.msra.mxu0 0.0
    %101 = vmatprep.subr.mxu0 0.0
    %102 = vmatpush2.msra.mxu0 0.0
    %103 = vmatprep.subr.mxu0 0.0
    %104 = vmatpush2.msra.mxu0 0.0
    %105 = vmatprep.subr.mxu0 0.0
    %106 = vmatpush2.msra.mxu0 0.0
    %107 = vmatprep.subr.mxu0 0.0
    %108 = vmatpush2.msra.mxu0 0.0
    %109 = vmatprep.mubr.f32.mxu0 0.0
    %110 = vmatmul.mubr.f32.gmra.mxu0 %v43
    %v111 = vpop.f32.mrf.mxu0
    %v112 = vadd.f32 %v39, %v111
    %v113 = vpop.f32.mrf.mxu0
    %114 = vdwg.mxu0
    %v115 = vmax.f32 %v112, 0.0
    %v116 = vld [vmem:[%s3] sm:$0xff]
    %v117 = vld [vmem:[%s3 + $0x8] sm:$0xff]
    %v118 = vld [vmem:[%s3 + $0x10] sm:$0xff]
    %v119 = vld [vmem:[%s3 + $0x18] sm:$0xff]
    %v120 = vld [vmem:[%s4] sm:$0x1]
    %v122 = vlaneseq
    %v123 = vshrl.u32 %v122, 7
    %v124 = vsub.s32 0, %v123
    %v125 = vrot.slane %v120, %v124
    %v128 = vsel %vm41, %v115, 0
    %130 = vmatprep.subr.mxu0 0.0
    %131 = vmatpush1.msra.mxu0 0.0
    %132 = vmatprep.subr.mxu0 0.0
    %133 = vmatpush1.msra.mxu0 0.0
    %134 = vmatprep.subr.mxu0 0.0
    %135 = vmatpush1.msra.mxu0 0.0
    %136 = vmatprep.subr.mxu0 0.0
    %137 = vmatpush1.msra.mxu0 0.0
    %138 = vmatprep.subr.mxu0 0.0
    %139 = vmatpush1.msra.mxu0 0.0
    %140 = vmatprep.subr.mxu0 0.0
    %141 = vmatpush1.msra.mxu0 0.0
    %142 = vmatprep.subr.mxu0 0.0
    %143 = vmatpush1.msra.mxu0 0.0
    %144 = vmatprep.subr.mxu0 0.0
    %145 = vmatpush1.msra.mxu0 0.0
    %146 = vmatprep.subr.mxu0 0.0
    %147 = vmatpush1.msra.mxu0 0.0
    %148 = vmatprep.subr.mxu0 0.0
    %149 = vmatpush1.msra.mxu0 0.0
    %150 = vmatprep.subr.mxu0 0.0
    %151 = vmatpush1.msra.mxu0 0.0
    %152 = vmatprep.subr.mxu0 0.0
    %153 = vmatpush1.msra.mxu0 0.0
    %154 = vmatprep.subr.mxu0 0.0
    %155 = vmatpush1.msra.mxu0 %v119
    %156 = vmatprep.subr.mxu0 0.0
    %157 = vmatpush1.msra.mxu0 %v118
    %158 = vmatprep.subr.mxu0 0.0
    %159 = vmatpush1.msra.mxu0 %v117
    %160 = vmatprep.subr.mxu0 0.0
    %161 = vmatpush1.msra.mxu0 %v116
    %162 = vmatprep.subr.mxu0 0.0
    %163 = vmatpush2.msra.mxu0 0.0
    %164 = vmatprep.subr.mxu0 0.0
    %165 = vmatpush2.msra.mxu0 0.0
    %166 = vmatprep.subr.mxu0 0.0
    %167 = vmatpush2.msra.mxu0 0.0
    %168 = vmatprep.subr.mxu0 0.0
    %169 = vmatpush2.msra.mxu0 0.0
    %170 = vmatprep.subr.mxu0 0.0
    %171 = vmatpush2.msra.mxu0 0.0
    %172 = vmatprep.subr.mxu0 0.0
    %173 = vmatpush2.msra.mxu0 0.0
    %174 = vmatprep.subr.mxu0 0.0
    %175 = vmatpush2.msra.mxu0 0.0
    %176 = vmatprep.subr.mxu0 0.0
    %177 = vmatpush2.msra.mxu0 0.0
    %178 = vmatprep.subr.mxu0 0.0
    %179 = vmatpush2.msra.mxu0 0.0
    %180 = vmatprep.subr.mxu0 0.0
    %181 = vmatpush2.msra.mxu0 0.0
    %182 = vmatprep.subr.mxu0 0.0
    %183 = vmatpush2.msra.mxu0 0.0
    %184 = vmatprep.subr.mxu0 0.0
    %185 = vmatpush2.msra.mxu0 0.0
    %186 = vmatprep.subr.mxu0 0.0
    %187 = vmatpush2.msra.mxu0 0.0
    %188 = vmatprep.subr.mxu0 0.0
    %189 = vmatpush2.msra.mxu0 0.0
    %190 = vmatprep.subr.mxu0 0.0
    %191 = vmatpush2.msra.mxu0 0.0
    %192 = vmatprep.subr.mxu0 0.0
    %193 = vmatpush2.msra.mxu0 0.0
    %194 = vmatprep.mubr.f32.mxu0 0.0
    %195 = vmatmul.mubr.f32.gmra.mxu0 %v128
    %v196 = vpop.f32.mrf.mxu0
    %v197 = vadd.f32 %v125, %v196
    %v198 = vpop.f32.mrf.mxu0
    %199 = vdwg.mxu0
    %v200 = vmax.f32 %v197, 0.0
    %v201 = vld [vmem:[%s5] sm:$0x1]
    %v202 = vld [vmem:[#allocation2] sm:$0x1]
    %204 = vset.pattern.permute.xlu0 0
    %205 = vperm.xlu0 %204, %v202
    %v206 = vpop.permute.xlu0 %205
    %v208 = vlaneseq
    %v209 = vshrl.u32 %v208, 7
    %v210 = vsub.s32 0, %v209
    %v211 = vrot.slane %v206, %v210
    %vm212 = vcmask 130048
    %v214 = vsel %vm212, %v201, 0
    %v217 = vsel %vm212, %v200, 0
    %219 = vmatprep.subr.mxu0 0.0
    %220 = vmatpush1.xpose.msra.mxu0 0.0
    %221 = vmatprep.subr.mxu0 0.0
    %222 = vmatpush1.xpose.msra.mxu0 0.0
    %223 = vmatprep.subr.mxu0 0.0
    %224 = vmatpush1.xpose.msra.mxu0 0.0
    %225 = vmatprep.subr.mxu0 0.0
    %226 = vmatpush1.xpose.msra.mxu0 0.0
    %227 = vmatprep.subr.mxu0 0.0
    %228 = vmatpush1.xpose.msra.mxu0 0.0
    %229 = vmatprep.subr.mxu0 0.0
    %230 = vmatpush1.xpose.msra.mxu0 0.0
    %231 = vmatprep.subr.mxu0 0.0
    %232 = vmatpush1.xpose.msra.mxu0 0.0
    %233 = vmatprep.subr.mxu0 0.0
    %234 = vmatpush1.xpose.msra.mxu0 0.0
    %235 = vmatprep.subr.mxu0 0.0
    %236 = vmatpush1.xpose.msra.mxu0 0.0
    %237 = vmatprep.subr.mxu0 0.0
    %238 = vmatpush1.xpose.msra.mxu0 0.0
    %239 = vmatprep.subr.mxu0 0.0
    %240 = vmatpush1.xpose.msra.mxu0 0.0
    %241 = vmatprep.subr.mxu0 0.0
    %242 = vmatpush1.xpose.msra.mxu0 0.0
    %243 = vmatprep.subr.mxu0 0.0
    %244 = vmatpush1.xpose.msra.mxu0 0.0
    %245 = vmatprep.subr.mxu0 0.0
    %246 = vmatpush1.xpose.msra.mxu0 0.0
    %247 = vmatprep.subr.mxu0 0.0
    %248 = vmatpush1.xpose.msra.mxu0 0.0
    %249 = vmatprep.subr.mxu0 0.0
    %250 = vmatpush1.xpose.msra.mxu0 %v217
    %251 = vmatprep.subr.mxu0 0.0
    %252 = vmatpush2.xpose.msra.mxu0 0.0
    %253 = vmatprep.subr.mxu0 0.0
    %254 = vmatpush2.xpose.msra.mxu0 0.0
    %255 = vmatprep.subr.mxu0 0.0
    %256 = vmatpush2.xpose.msra.mxu0 0.0
    %257 = vmatprep.subr.mxu0 0.0
    %258 = vmatpush2.xpose.msra.mxu0 0.0
    %259 = vmatprep.subr.mxu0 0.0
    %260 = vmatpush2.xpose.msra.mxu0 0.0
    %261 = vmatprep.subr.mxu0 0.0
    %262 = vmatpush2.xpose.msra.mxu0 0.0
    %263 = vmatprep.subr.mxu0 0.0
    %264 = vmatpush2.xpose.msra.mxu0 0.0
    %265 = vmatprep.subr.mxu0 0.0
    %266 = vmatpush2.xpose.msra.mxu0 0.0
    %267 = vmatprep.subr.mxu0 0.0
    %268 = vmatpush2.xpose.msra.mxu0 0.0
    %269 = vmatprep.subr.mxu0 0.0
    %270 = vmatpush2.xpose.msra.mxu0 0.0
    %271 = vmatprep.subr.mxu0 0.0
    %272 = vmatpush2.xpose.msra.mxu0 0.0
    %273 = vmatprep.subr.mxu0 0.0
    %274 = vmatpush2.xpose.msra.mxu0 0.0
    %275 = vmatprep.subr.mxu0 0.0
    %276 = vmatpush2.xpose.msra.mxu0 0.0
    %277 = vmatprep.subr.mxu0 0.0
    %278 = vmatpush2.xpose.msra.mxu0 0.0
    %279 = vmatprep.subr.mxu0 0.0
    %280 = vmatpush2.xpose.msra.mxu0 0.0
    %281 = vmatprep.subr.mxu0 0.0
    %282 = vmatpush2.xpose.msra.mxu0 0.0
    %283 = vmatprep.mubr.f32.mxu0 0.0
    %284 = vmatmul.mubr.f32.gmra.mxu0 %v214
    %v285 = vpop.f32.mrf.mxu0
    %v286 = vadd.f32 %v211, %v285
    %v287 = vpop.f32.mrf.mxu0
    %288 = vdwg.mxu0
    %v289 = vxor.u32 %v286, 2147483648
    %v290 = vmul.f32 %v289, 1.442695
    %v291 = vpow.pop %v290
    %v292 = vadd.f32 %v291, 1.0
    %v293 = vrcp.pop %v292
    %v294 = vmul.f32 1.0, %v293
    %vm295 = vcmask 57344
    %296 = vst.msk [vmem:[#allocation3] sm:$0x1] %vm295, %v294
    // Predicated region
    $region30: #{tpu_custom_call.1} parent=1 // pred_check
      _
    $region31: #{tpu_custom_call.1} parent=1 // pred_check_branch
      %298 = sbr.rel (0) target = $region33
    $region32: #{tpu_custom_call.1} parent=1 // pred_region
      %s300 = ssub.s32 16, 16
      %301 = vsyncadd [#allocation4], %s300
      %s303 = sshll.u32 [#allocation3], 4
      %s304 = int_to_ptr.vmem [resolvable:$true] %s303
      %306 = dma.vmem_to_hbm [thread:$0]  %s304, 16, %s7, [#allocation4]
    $region33: #{tpu_custom_call.1} parent=1 // pred_fallthru
      _
    // Predicated region
    $region34: #{tpu_custom_call.1} parent=1 // pred_check
      _
    $region35: #{tpu_custom_call.1} parent=1 // pred_check_branch
      %308 = sbr.rel (0) target = $region37
    $region36: #{tpu_custom_call.1} parent=1 // pred_region
      %309 = dma.done [#allocation4], 16
    $region37: #{tpu_custom_call.1} parent=1 // pred_fallthru
      _
    %310 = vsyncpa [#allocation4], 1

</llo_original>
